<compile_context>
chip_gen: v7x
topology: tpu7x:2x2x1
jax: 0.10.0
libtpu: 0.0.40
codegen_flags: <defaults>
</compile_context>

<pallas_src>
import jax
import jax.numpy as jnp
from jax.experimental import pallas as pl
from jax.experimental.pallas import tpu as pltpu


def _linear_kernel(w_ref, b_ref, x_ref, o_ref):
    # w_ref: (F_in,) f32 in SMEM, b_ref: (1,) f32 in SMEM
    # x_ref: (F_in, TB) in VMEM (transposed input block)
    # o_ref: (1, TB)   in VMEM (lane-dense output block)
    f_in, tb = x_ref.shape
    xb = x_ref[...].astype(jnp.float32)                    # (F_in, TB)
    acc = jnp.full((1, tb), b_ref[0], dtype=jnp.float32)   # broadcast bias
    for k in range(f_in):                                  # static unroll: 3 VPU FMAs
        acc = acc + w_ref[k] * xb[k:k + 1, :]
    o_ref[...] = acc.astype(o_ref.dtype)


def linear_forward(x, weight, bias, *, block_b=2048):
    """y = x @ weight.T + bias  (PyTorch nn.Linear semantics).

    x: (B, F_in), weight: (F_out, F_in) with F_out == 1, bias: (F_out,)
    Returns (B, F_out).
    """
    B, F_in = x.shape
    F_out = weight.shape[0]
    assert F_out == 1, "kernel is specialized for nn.Linear(3, 1)"

    # Batch tile: multiple of 128 lanes, at most block_b, at least one full block.
    tb = min(block_b, max(128, pl.cdiv(B, 128) * 128))
    tb = pl.cdiv(tb, 128) * 128
    b_pad = pl.cdiv(B, tb) * tb

    # Lane-dense transposed layout (glue reshapes in plain JAX).
    x_t = x.T                                              # (F_in, B)
    if b_pad != B:
        x_t = jnp.pad(x_t, ((0, 0), (0, b_pad - B)))       # zero-pad tail columns

    w_vec = weight.reshape(F_in).astype(jnp.float32)       # (F_in,) -> SMEM
    b_vec = bias.reshape(F_out).astype(jnp.float32)        # (1,)    -> SMEM

    itemsize = jnp.dtype(x.dtype).itemsize
    cost = pl.CostEstimate(
        flops=2 * B * F_in,
        transcendentals=0,
        bytes_accessed=(x.size + weight.size + bias.size + B * F_out) * itemsize,
    )

    y_t = pl.pallas_call(
        _linear_kernel,
        out_shape=jax.ShapeDtypeStruct((1, b_pad), x.dtype),
        grid_spec=pl.GridSpec(
            grid=(b_pad // tb,),
            in_specs=[
                pl.BlockSpec(memory_space=pltpu.MemorySpace.SMEM),   # weights (scalars)
                pl.BlockSpec(memory_space=pltpu.MemorySpace.SMEM),   # bias (scalar)
                pl.BlockSpec((F_in, tb), lambda i: (0, i)),          # x block (3, TB)
            ],
            out_specs=pl.BlockSpec((1, tb), lambda i: (0, i)),       # lane-dense (1, TB)
        ),
        compiler_params=pltpu.CompilerParams(
            dimension_semantics=("parallel",),   # batch axis -> both TCs on v7x
        ),
        cost_estimate=cost,
    )(w_vec, b_vec, x_t)

    return y_t[0, :B].reshape(B, F_out)


if __name__ == "__main__":
    key = jax.random.PRNGKey(0)
    k_x, k_w, k_b = jax.random.split(key, 3)

    B, F_in, F_out = 8, 3, 1

    # Deterministic "parameters" (mimicking nn.Linear(3, 1) init: U[-1/sqrt(3), 1/sqrt(3)]).
    bound = 1.0 / jnp.sqrt(jnp.float32(F_in))
    weight = jax.random.uniform(k_w, (F_out, F_in), jnp.float32, -bound, bound)
    bias = jax.random.uniform(k_b, (F_out,), jnp.float32, -bound, bound)

    x = jax.random.normal(k_x, (B, F_in), jnp.float32)

    y = linear_forward(x, weight, bias)
    y = jax.block_until_ready(y)

    # Reference check against plain JAX (same math as PyTorch nn.Linear).
    y_ref = x @ weight.T + bias
    assert y.shape == (B, F_out)
    assert jnp.allclose(y, y_ref, atol=1e-5, rtol=1e-5)

    print("KERNEL_OK")
</pallas_src>

<mosaic_0001>
module attributes {stable_mosaic.version = 11 : i64} {
  func.func @_linear_kernel(%arg0: i32, %arg1: memref<3xf32, #tpu.memory_space<smem>>, %arg2: memref<1xf32, #tpu.memory_space<smem>>, %arg3: memref<3x128xf32, #tpu.memory_space<vmem>>, %arg4: memref<1x128xf32, #tpu.memory_space<vmem>>) attributes {dimension_semantics = [#tpu.dimension_semantics<parallel>], iteration_bounds = array<i64: 1>, scalar_prefetch = 0 : i64, scratch_operands = 0 : i64, tpu.core_type = #tpu.core_type<tc>, window_params = [{transform_indices = @transform_0, window_bounds = array<i64: 3>}, {transform_indices = @transform_1, window_bounds = array<i64: 1>}, {transform_indices = @transform_2, window_bounds = array<i64: 3, 128>}, {transform_indices = @transform_3, window_bounds = array<i64: 1, 128>}]} {
    %c0 = arith.constant 0 : index
    %c0_0 = arith.constant 0 : index
    %0 = vector.load %arg3[%c0, %c0_0] : memref<3x128xf32, #tpu.memory_space<vmem>>, vector<3x128xf32>
    %c0_1 = arith.constant 0 : index
    %1 = memref.load %arg2[%c0_1] : memref<1xf32, #tpu.memory_space<smem>>
    %2 = vector.broadcast %1 : f32 to vector<1x128xf32>
    %c0_2 = arith.constant 0 : index
    %3 = memref.load %arg1[%c0_2] : memref<3xf32, #tpu.memory_space<smem>>
    %4 = vector.extract_strided_slice %0 {offsets = [0, 0], sizes = [1, 128], strides = [1, 1]} : vector<3x128xf32> to vector<1x128xf32>
    %5 = vector.broadcast %3 : f32 to vector<1x128xf32>
    %6 = arith.mulf %5, %4 : vector<1x128xf32>
    %7 = arith.addf %2, %6 : vector<1x128xf32>
    %c1 = arith.constant 1 : index
    %8 = memref.load %arg1[%c1] : memref<3xf32, #tpu.memory_space<smem>>
    %9 = vector.extract_strided_slice %0 {offsets = [1, 0], sizes = [1, 128], strides = [1, 1]} : vector<3x128xf32> to vector<1x128xf32>
    %10 = vector.broadcast %8 : f32 to vector<1x128xf32>
    %11 = arith.mulf %10, %9 : vector<1x128xf32>
    %12 = arith.addf %7, %11 : vector<1x128xf32>
    %c2 = arith.constant 2 : index
    %13 = memref.load %arg1[%c2] : memref<3xf32, #tpu.memory_space<smem>>
    %14 = vector.extract_strided_slice %0 {offsets = [2, 0], sizes = [1, 128], strides = [1, 1]} : vector<3x128xf32> to vector<1x128xf32>
    %15 = vector.broadcast %13 : f32 to vector<1x128xf32>
    %16 = arith.mulf %15, %14 : vector<1x128xf32>
    %17 = arith.addf %12, %16 : vector<1x128xf32>
    %c0_3 = arith.constant 0 : index
    %c0_4 = arith.constant 0 : index
    %18 = vector.load %arg4[%c0_3, %c0_4] : memref<1x128xf32, #tpu.memory_space<vmem>>, vector<1x128xf32>
    tpu.vector_store %arg4[%c0_3, %c0_4], %17 {strides = array<i32>} : memref<1x128xf32, #tpu.memory_space<vmem>>, vector<1x128xf32>,
    return
  }
  func.func @transform_0(%arg0: i32) -> i32 {
    %c0_i32 = arith.constant 0 : i32
    %c0_i32_0 = arith.constant 0 : i32
    return %c0_i32 : i32
  }
  func.func @transform_1(%arg0: i32) -> i32 {
    %c0_i32 = arith.constant 0 : i32
    %c0_i32_0 = arith.constant 0 : i32
    return %c0_i32 : i32
  }
  func.func @transform_2(%arg0: i32) -> (i32, i32) {
    %c0_i32 = arith.constant 0 : i32
    %c0_i32_0 = arith.constant 0 : i32
    return %c0_i32, %arg0 : i32, i32
  }
  func.func @transform_3(%arg0: i32) -> (i32, i32) {
    %c0_i32 = arith.constant 0 : i32
    %c0_i32_0 = arith.constant 0 : i32
    return %c0_i32, %arg0 : i32, i32
  }
}

</mosaic_0001>

<llo_original>
// kernel: tpu_custom_call.1
$region0: #{tpu_custom_call.1}
  #allocation0 [shape = 'u32[]', space=smem, size = 0x4, offset = 0x4, fixed_abs, tag = 'smem constant byte address 0x4 - core index']
  #allocation1 [shape = 'u32[144,128]{1,0:T(1,128)}', space=vmem, size = 0x12000, scoped, tag = 'internal scratch']
  #allocation2 [shape = 'f32[1]{0:T(128)S(6)}', space=smem, size = 0x200, scoped, tag = 'scoped memory for tpu_custom_call.1']
  %s0 = inlined_call_operand.vmem [shape: f32[3], index: 0, kind: input, shape index: {}]
  %s1 = inlined_call_operand.<no memory space> [shape: f32[1], index: 1, kind: input, shape index: {}]
  %s2 = inlined_call_operand.vmem [shape: f32[3,128], index: 2, kind: input, shape index: {}]
  %s3 = inlined_call_operand.hbm [shape: f32[1,128], index: 3, kind: output, shape index: {}]
  %s4 = sld [smem:[#allocation0]]
  $region26: #{tpu_custom_call.1} parent=0
    _
  %s6 = ssub.s32 1, %s4
  %s7 = scalar_select 0, %s6, %s4
  %8 = sst [smem:[#allocation2]] %s1
  $region1: #{tpu_custom_call.1} parent=0
    #allocation3 [shape = 'u8[512]{0}', space=smem, size = 0x200, scoped, tag = 'input window, operand 0, single buffered']
    #allocation4 [shape = 's32[1]{0}', space=sflag, size = 0x4, scoped, tag = 'scoped memory for tpu_custom_call.1']
    #allocation5 [shape = 's32[1]{0}', space=sflag, size = 0x4, scoped, tag = 'scoped memory for tpu_custom_call.1']
    #allocation6 [shape = 'u8[512]{0}', space=vmem, size = 0x400, scoped, tag = 'output window, operand 0, single buffered']
    %9 = vsyncpa [#allocation5], 0
    %10 = vsyncpa [#allocation4], 0
    // Predicated region
    $region2: #{tpu_custom_call.1} parent=1 // pred_check
      _
    $region3: #{tpu_custom_call.1} parent=1 // pred_check_branch
      %12 = sbr.rel (0) target = $region5
    $region4: #{tpu_custom_call.1} parent=1 // pred_region
      %s14 = ssub.s32 16, 16
      %15 = vsyncadd [#allocation5], %s14
      %s17 = sshll.u32 %s0, 4
      %s18 = int_to_ptr.vmem [resolvable:$true] %s17
      %20 = dma.vmem_to_smem %s18, 16, [#allocation3], [#allocation5]
    $region5: #{tpu_custom_call.1} parent=1 // pred_fallthru
      _
    // Predicated region
    $region6: #{tpu_custom_call.1} parent=1 // pred_check
      _
    $region7: #{tpu_custom_call.1} parent=1 // pred_check_branch
      %22 = sbr.rel (0) target = $region9
    $region8: #{tpu_custom_call.1} parent=1 // pred_region
      _
    $region9: #{tpu_custom_call.1} parent=1 // pred_fallthru
      _
    // Predicated region
    $region10: #{tpu_custom_call.1} parent=1 // pred_check
      _
    $region11: #{tpu_custom_call.1} parent=1 // pred_check_branch
      %24 = sbr.rel (0) target = $region13
    $region12: #{tpu_custom_call.1} parent=1 // pred_region
      _
    $region13: #{tpu_custom_call.1} parent=1 // pred_fallthru
      _
    // Predicated region
    $region14: #{tpu_custom_call.1} parent=1 // pred_check
      _
    $region15: #{tpu_custom_call.1} parent=1 // pred_check_branch
      %26 = sbr.rel (0) target = $region17
    $region16: #{tpu_custom_call.1} parent=1 // pred_region
      %27 = dma.done [#allocation5], 16
    $region17: #{tpu_custom_call.1} parent=1 // pred_fallthru
      _
    %28 = sfence
    %v29 = vld [vmem:[%s2] sm:$0x7]
    %s30 = sld [smem:[#allocation2]]
    %v31 = vstv %s30
    %s32 = sld [smem:[#allocation3]]
    %v33 = vstv %s32
    %v34 = vmul.f32 %v33, %v29
    %v35 = vadd.f32 %v31, %v34
    %s36 = sld [smem:[#allocation3 + $0x1]]
    %v37 = vstv %s36
    %v38 = vmul.f32 %v37, %v29
    %v40 = vrot.slane %v38, 1
    %v42 = vadd.f32 %v35, %v40
    %s43 = sld [smem:[#allocation3 + $0x2]]
    %v44 = vstv %s43
    %v45 = vmul.f32 %v44, %v29
    %v47 = vrot.slane %v45, 2
    %v49 = vadd.f32 %v42, %v47
    %50 = vst [vmem:[#allocation6] sm:$0x1] %v49
    // Predicated region
    $region18: #{tpu_custom_call.1} parent=1 // pred_check
      _
    $region19: #{tpu_custom_call.1} parent=1 // pred_check_branch
      %52 = sbr.rel (0) target = $region21
    $region20: #{tpu_custom_call.1} parent=1 // pred_region
      %s54 = ssub.s32 16, 16
      %55 = vsyncadd [#allocation4], %s54
      %s57 = sshll.u32 [#allocation6], 4
      %s58 = int_to_ptr.vmem [resolvable:$true] %s57
      %60 = dma.vmem_to_hbm [thread:$0]  %s58, 16, %s3, [#allocation4]
    $region21: #{tpu_custom_call.1} parent=1 // pred_fallthru
      _
    // Predicated region
    $region22: #{tpu_custom_call.1} parent=1 // pred_check
      _
    $region23: #{tpu_custom_call.1} parent=1 // pred_check_branch
      %62 = sbr.rel (0) target = $region25
    $region24: #{tpu_custom_call.1} parent=1 // pred_region
      %63 = dma.done [#allocation4], 16
    $region25: #{tpu_custom_call.1} parent=1 // pred_fallthru
      _
    %64 = vsyncpa [#allocation4], 1
    %65 = vsyncpa [#allocation5], 1

</llo_original>
